<compile_context>
chip_gen: v5e
topology: v5e:2x2
jax: 0.10.0
libtpu: 0.0.40
codegen_flags: <defaults>
</compile_context>

<pallas_src>
import functools
import math

import jax
import jax.numpy as jnp
from jax.experimental import pallas as pl
from jax.experimental.pallas import tpu as pltpu


def _round_up(x, m):
    return ((x + m - 1) // m) * m


def _gaussian_sample_kernel(x_ref, w_ref, b_ref, eps_ref,
                            z_ref, mu_ref, lv_ref, *, out_f, out_p):
    # One fused MXU matmul: [TB, in_f] @ [in_f, 2*out_p] -> f32 [TB, 2*out_p].
    # bf16 inputs hit the native bf16 MXU path; accumulation is f32.
    y = jnp.dot(x_ref[...], w_ref[...],
                preferred_element_type=jnp.float32) + b_ref[...]

    # Both halves start on a lane-aligned (multiple-of-128) offset.
    mu = y[:, :out_f]
    lv_pre = y[:, out_p:out_p + out_f]

    # softplus(p) = max(p, 0) + log1p(exp(-|p|))   (numerically stable, f32 —
    # keeps the elementwise math off v5e's missing bf16 VPU/EUP paths).
    log_var = jnp.maximum(lv_pre, 0.0) + jnp.log1p(jnp.exp(-jnp.abs(lv_pre)))

    # std = exp(0.5 * log_var); z = mu + std * eps
    std = jnp.exp(0.5 * log_var)
    z = mu + std * eps_ref[...].astype(jnp.float32)

    z_ref[...] = z.astype(z_ref.dtype)
    mu_ref[...] = mu.astype(mu_ref.dtype)
    lv_ref[...] = log_var.astype(lv_ref.dtype)


def pack_gaussian_sample_params(w_mu, b_mu, w_lv, b_lv, *,
                                weight_dtype=jnp.bfloat16):
    """Pack the two Linear layers into one fused [in_f, 2*out_p] weight and
    [1, 2*out_p] bias.  Call ONCE at parameter-init time (a per-call
    concat+pad costs a full extra HBM pass over the weights)."""
    in_f, out_f = w_mu.shape
    out_p = _round_up(out_f, 128)  # split point must be lane-aligned

    def pad_cols(a):
        return jnp.pad(a, ((0, 0), (0, out_p - out_f)))

    w_fused = jnp.concatenate(
        [pad_cols(w_mu), pad_cols(w_lv)], axis=1).astype(weight_dtype)
    b_fused = jnp.concatenate(
        [pad_cols(b_mu.reshape(1, out_f)), pad_cols(b_lv.reshape(1, out_f))],
        axis=1).astype(jnp.float32)  # bias stays f32: tiny and resident
    return w_fused, b_fused, out_f


def gaussian_sample(x, w_fused, b_fused, out_f, eps, *,
                    block_b=512, stream_dtype=jnp.bfloat16):
    """x: [B, in_f]; w_fused: [in_f, 2*out_p]; b_fused: [1, 2*out_p];
    eps: [B, out_f].  Returns (z, mu, log_var), each [B, out_f] in
    `stream_dtype`."""
    B, in_f = x.shape
    out_p = b_fused.shape[1] // 2

    # ---- batch tiling: near-minimal padding --------------------------------
    n_tiles = max(1, -(-B // block_b))           # ceil(B / block_b)
    # v7x has 2 TensorCores: a single-step "parallel" grid leaves one idle.
    if n_tiles == 1 and B >= 256:
        n_tiles = 2
    TB = _round_up(-(-B // n_tiles), 8)
    Bp = n_tiles * TB

    # ---- generation-aware VMEM budget ---------------------------------------
    try:
        vmem_cap = int(getattr(pltpu.get_tpu_info(), "vmem_capacity_bytes"))
    except Exception:
        vmem_cap = 64 << 20                      # conservative (v7x per-TC)
    vmem_budget = int(0.75 * vmem_cap)

    bytes_s = jnp.dtype(stream_dtype).itemsize
    bytes_w = jnp.dtype(w_fused.dtype).itemsize

    def vmem_needed(tb):
        # Count the constant-index weight/bias twice in case Pallas
        # double-buffers them; x/eps/3 outputs are double-buffered tiles.
        resident = 2 * (in_f * 2 * out_p * bytes_w) + 2 * (2 * out_p * 4)
        streamed = 2 * tb * (in_f * bytes_s + 4 * out_f * bytes_s)
        return resident + streamed + (2 << 20)

    while vmem_needed(TB) > vmem_budget and TB > 8:
        TB = max(8, _round_up(TB // 2, 8))
        n_tiles = -(-B // TB)
        Bp = n_tiles * TB
    # TODO(synk): if the resident fused weight alone exceeds the VMEM budget
    # (very large in_f * out_f), add a K-reduction grid axis (last,
    # "arbitrary") with an f32 VMEM accumulator instead of shrinking TB.

    # ---- stream-dtype cast + (only if needed) batch padding -----------------
    x_s = x.astype(stream_dtype)
    eps_s = eps.astype(stream_dtype)
    if Bp != B:
        x_s = jnp.pad(x_s, ((0, Bp - B), (0, 0)))
        eps_s = jnp.pad(eps_s, ((0, Bp - B), (0, 0)))

    out_sds = jax.ShapeDtypeStruct((Bp, out_f), stream_dtype)
    kernel = functools.partial(_gaussian_sample_kernel, out_f=out_f, out_p=out_p)

    z, mu, log_var = pl.pallas_call(
        kernel,
        out_shape=(out_sds, out_sds, out_sds),
        grid=(Bp // TB,),
        in_specs=[
            pl.BlockSpec((TB, in_f), lambda i: (i, 0)),          # x (streamed)
            pl.BlockSpec((in_f, 2 * out_p), lambda i: (0, 0)),   # fused W (resident)
            pl.BlockSpec((1, 2 * out_p), lambda i: (0, 0)),      # fused b (resident)
            pl.BlockSpec((TB, out_f), lambda i: (i, 0)),         # eps (streamed)
        ],
        out_specs=(
            pl.BlockSpec((TB, out_f), lambda i: (i, 0)),
            pl.BlockSpec((TB, out_f), lambda i: (i, 0)),
            pl.BlockSpec((TB, out_f), lambda i: (i, 0)),
        ),
        compiler_params=pltpu.CompilerParams(
            dimension_semantics=("parallel",),
            vmem_limit_bytes=int(min(max(vmem_needed(TB), 32 << 20),
                                     vmem_budget)),
        ),
    )(x_s, w_fused, b_fused, eps_s)

    if Bp != B:
        z, mu, log_var = z[:B], mu[:B], log_var[:B]
    return z, mu, log_var


def _init_linear_params(key, in_features, out_features):
    """Deterministic init mimicking nn.Linear defaults (uniform +/- 1/sqrt(in))."""
    k_w, k_b = jax.random.split(key)
    bound = 1.0 / math.sqrt(in_features)
    # stored pre-transposed: [in_features, out_features]
    w = jax.random.uniform(k_w, (in_features, out_features), jnp.float32,
                           minval=-bound, maxval=bound)
    b = jax.random.uniform(k_b, (out_features,), jnp.float32,
                           minval=-bound, maxval=bound)
    return w, b


if __name__ == "__main__":
    key = jax.random.PRNGKey(0)
    k_x, k_mu, k_lv, k_eps = jax.random.split(key, 4)

    B = 8
    in_features = 32
    out_features = 16

    x = jax.random.normal(k_x, (B, in_features), jnp.float32)
    w_mu, b_mu = _init_linear_params(k_mu, in_features, out_features)
    w_lv, b_lv = _init_linear_params(k_lv, in_features, out_features)
    # epsilon drawn deterministically outside the kernel (same role as
    # torch.randn in reparametrize).
    # TODO(synk): optionally draw eps in-kernel via pltpu.prng_seed +
    # pltpu.stateful_normal to drop one HBM stream (loses torch.randn parity).
    eps = jax.random.normal(k_eps, (B, out_features), jnp.float32)

    # Plain-JAX reference.
    mu_ref = x @ w_mu + b_mu
    lv_ref = jax.nn.softplus(x @ w_lv + b_lv)
    z_ref = mu_ref + jnp.exp(0.5 * lv_ref) * eps

    # 1) f32 streaming path: tight check of the forward semantics.
    w_f32, b_f32, of = pack_gaussian_sample_params(
        w_mu, b_mu, w_lv, b_lv, weight_dtype=jnp.float32)
    z, mu, log_var = gaussian_sample(x, w_f32, b_f32, of, eps,
                                     stream_dtype=jnp.float32)
    jax.block_until_ready((z, mu, log_var))
    assert jnp.allclose(mu, mu_ref, atol=1e-5), "mu mismatch (f32)"
    assert jnp.allclose(log_var, lv_ref, atol=1e-5), "log_var mismatch (f32)"
    assert jnp.allclose(z, z_ref, atol=1e-5), "z mismatch (f32)"

    # 2) bf16 streaming path (the bandwidth-optimized default): looser tol.
    w_b16, b_b16, of = pack_gaussian_sample_params(w_mu, b_mu, w_lv, b_lv)
    z16, mu16, lv16 = gaussian_sample(x, w_b16, b_b16, of, eps)
    jax.block_until_ready((z16, mu16, lv16))
    assert jnp.allclose(mu16.astype(jnp.float32), mu_ref,
                        atol=5e-2, rtol=5e-2), "mu mismatch (bf16)"
    assert jnp.allclose(lv16.astype(jnp.float32), lv_ref,
                        atol=5e-2, rtol=5e-2), "log_var mismatch (bf16)"
    assert jnp.allclose(z16.astype(jnp.float32), z_ref,
                        atol=5e-2, rtol=5e-2), "z mismatch (bf16)"

    print("KERNEL_OK")
</pallas_src>

<mosaic_0001>
module attributes {stable_mosaic.version = 11 : i64} {
  func.func @_gaussian_sample_kernel(%arg0: i32, %arg1: memref<8x32xf32, #tpu.memory_space<vmem>>, %arg2: memref<32x256xf32, #tpu.memory_space<vmem>>, %arg3: memref<1x256xf32, #tpu.memory_space<vmem>>, %arg4: memref<8x16xf32, #tpu.memory_space<vmem>>, %arg5: memref<8x16xf32, #tpu.memory_space<vmem>>, %arg6: memref<8x16xf32, #tpu.memory_space<vmem>>, %arg7: memref<8x16xf32, #tpu.memory_space<vmem>>) attributes {dimension_semantics = [#tpu.dimension_semantics<parallel>], iteration_bounds = array<i64: 1>, scalar_prefetch = 0 : i64, scratch_operands = 0 : i64, tpu.core_type = #tpu.core_type<tc>, window_params = [{transform_indices = @transform_0, window_bounds = array<i64: 8, 32>}, {pipeline_mode = #tpu.pipeline_mode<synchronous>, transform_indices = @transform_1, window_bounds = array<i64: 32, 256>}, {pipeline_mode = #tpu.pipeline_mode<synchronous>, transform_indices = @transform_2, window_bounds = array<i64: 1, 256>}, {transform_indices = @transform_3, window_bounds = array<i64: 8, 16>}, {transform_indices = @transform_4, window_bounds = array<i64: 8, 16>}, {transform_indices = @transform_5, window_bounds = array<i64: 8, 16>}, {transform_indices = @transform_6, window_bounds = array<i64: 8, 16>}]} {
    %c0 = arith.constant 0 : index
    %c0_0 = arith.constant 0 : index
    %0 = vector.load %arg1[%c0, %c0_0] : memref<8x32xf32, #tpu.memory_space<vmem>>, vector<8x32xf32>
    %c0_1 = arith.constant 0 : index
    %c0_2 = arith.constant 0 : index
    %1 = vector.load %arg2[%c0_1, %c0_2] : memref<32x256xf32, #tpu.memory_space<vmem>>, vector<32x256xf32>
    %cst = arith.constant dense<0.000000e+00> : vector<8x256xf32>
    %2 = tpu.matmul %0, %1, %cst {dimension_numbers = #tpu.dot_dimension_numbers<[1], [0], [0], [1], [0, 0, 1, 1], [], []>} : vector<8x32xf32>, vector<32x256xf32>, vector<8x256xf32> -> vector<8x256xf32>
    %c0_3 = arith.constant 0 : index
    %c0_4 = arith.constant 0 : index
    %3 = vector.load %arg3[%c0_3, %c0_4] : memref<1x256xf32, #tpu.memory_space<vmem>>, vector<1x256xf32>
    %4 = vector.broadcast %3 : vector<1x256xf32> to vector<8x256xf32>
    %5 = arith.addf %2, %4 : vector<8x256xf32>
    %6 = vector.extract_strided_slice %5 {offsets = [0, 0], sizes = [8, 16], strides = [1, 1]} : vector<8x256xf32> to vector<8x16xf32>
    %7 = vector.extract_strided_slice %5 {offsets = [0, 128], sizes = [8, 16], strides = [1, 1]} : vector<8x256xf32> to vector<8x16xf32>
    %cst_5 = arith.constant 0.000000e+00 : f32
    %8 = vector.broadcast %cst_5 : f32 to vector<8x16xf32>
    %9 = arith.maximumf %7, %8 : vector<8x16xf32>
    %10 = math.absf %7 : vector<8x16xf32>
    %cst_6 = arith.constant 0.000000e+00 : f32
    %11 = vector.broadcast %cst_6 : f32 to vector<8x16xf32>
    %12 = arith.subf %11, %10 : vector<8x16xf32>
    %13 = math.exp %12 : vector<8x16xf32>
    %14 = math.log1p %13 : vector<8x16xf32>
    %15 = arith.addf %9, %14 : vector<8x16xf32>
    %cst_7 = arith.constant 5.000000e-01 : f32
    %16 = vector.broadcast %cst_7 : f32 to vector<8x16xf32>
    %17 = arith.mulf %16, %15 : vector<8x16xf32>
    %18 = math.exp %17 : vector<8x16xf32>
    %c0_8 = arith.constant 0 : index
    %c0_9 = arith.constant 0 : index
    %19 = vector.load %arg4[%c0_8, %c0_9] : memref<8x16xf32, #tpu.memory_space<vmem>>, vector<8x16xf32>
    %20 = arith.mulf %18, %19 : vector<8x16xf32>
    %21 = arith.addf %6, %20 : vector<8x16xf32>
    %c0_10 = arith.constant 0 : index
    %c0_11 = arith.constant 0 : index
    %22 = vector.load %arg5[%c0_10, %c0_11] : memref<8x16xf32, #tpu.memory_space<vmem>>, vector<8x16xf32>
    tpu.vector_store %arg5[%c0_10, %c0_11], %21 {strides = array<i32>} : memref<8x16xf32, #tpu.memory_space<vmem>>, vector<8x16xf32>,
    %c0_12 = arith.constant 0 : index
    %c0_13 = arith.constant 0 : index
    %23 = vector.load %arg6[%c0_12, %c0_13] : memref<8x16xf32, #tpu.memory_space<vmem>>, vector<8x16xf32>
    tpu.vector_store %arg6[%c0_12, %c0_13], %6 {strides = array<i32>} : memref<8x16xf32, #tpu.memory_space<vmem>>, vector<8x16xf32>,
    %c0_14 = arith.constant 0 : index
    %c0_15 = arith.constant 0 : index
    %24 = vector.load %arg7[%c0_14, %c0_15] : memref<8x16xf32, #tpu.memory_space<vmem>>, vector<8x16xf32>
    tpu.vector_store %arg7[%c0_14, %c0_15], %15 {strides = array<i32>} : memref<8x16xf32, #tpu.memory_space<vmem>>, vector<8x16xf32>,
    return
  }
  func.func @transform_0(%arg0: i32) -> (i32, i32) {
    %c0_i32 = arith.constant 0 : i32
    %c0_i32_0 = arith.constant 0 : i32
    return %arg0, %c0_i32 : i32, i32
  }
  func.func @transform_1(%arg0: i32) -> (i32, i32) {
    %c0_i32 = arith.constant 0 : i32
    %c0_i32_0 = arith.constant 0 : i32
    %c0_i32_1 = arith.constant 0 : i32
    return %c0_i32, %c0_i32_0 : i32, i32
  }
  func.func @transform_2(%arg0: i32) -> (i32, i32) {
    %c0_i32 = arith.constant 0 : i32
    %c0_i32_0 = arith.constant 0 : i32
    %c0_i32_1 = arith.constant 0 : i32
    return %c0_i32, %c0_i32_0 : i32, i32
  }
  func.func @transform_3(%arg0: i32) -> (i32, i32) {
    %c0_i32 = arith.constant 0 : i32
    %c0_i32_0 = arith.constant 0 : i32
    return %arg0, %c0_i32 : i32, i32
  }
  func.func @transform_4(%arg0: i32) -> (i32, i32) {
    %c0_i32 = arith.constant 0 : i32
    %c0_i32_0 = arith.constant 0 : i32
    return %arg0, %c0_i32 : i32, i32
  }
  func.func @transform_5(%arg0: i32) -> (i32, i32) {
    %c0_i32 = arith.constant 0 : i32
    %c0_i32_0 = arith.constant 0 : i32
    return %arg0, %c0_i32 : i32, i32
  }
  func.func @transform_6(%arg0: i32) -> (i32, i32) {
    %c0_i32 = arith.constant 0 : i32
    %c0_i32_0 = arith.constant 0 : i32
    return %arg0, %c0_i32 : i32, i32
  }
}

</mosaic_0001>

<llo_original>
// kernel: tpu_custom_call.1
$region0: #{tpu_custom_call.1}
  #allocation0 [shape = 'u32[]', space=smem, size = 0x4, offset = 0x4, fixed_abs, tag = 'smem constant byte address 0x4 - core index']
  #allocation1 [shape = 'u32[72,128]{1,0:T(1,128)}', space=vmem, size = 0x9000, scoped, tag = 'internal scratch']
  %s0 = inlined_call_operand.hbm [shape: f32[8,32], index: 0, kind: input, shape index: {}]
  %s1 = inlined_call_operand.hbm [shape: f32[32,256], index: 1, kind: input, shape index: {}]
  %s2 = inlined_call_operand.hbm [shape: f32[1,256], index: 2, kind: input, shape index: {}]
  %s3 = inlined_call_operand.hbm [shape: f32[8,16], index: 3, kind: input, shape index: {}]
  %s4 = inlined_call_operand.hbm [shape: f32[8,16], index: 4, kind: output, shape index: {0}]
  %s5 = inlined_call_operand.hbm [shape: f32[8,16], index: 5, kind: output, shape index: {1}]
  %s6 = inlined_call_operand.hbm [shape: f32[8,16], index: 6, kind: output, shape index: {2}]
  %7 = xla_tuple %s4, %s5, %s6
  %s8 = sld [smem:[#allocation0]]
  $region58: #{tpu_custom_call.1} parent=0
    _
  %s10 = ssub.s32 1, %s8
  %s11 = scalar_select 0, %s10, %s8
  $region1: #{tpu_custom_call.1} parent=0
    #allocation2 [shape = 'u8[4096]{0}', space=vmem, size = 0x1000, scoped, tag = 'input window, operand 0, single buffered']
    #allocation3 [shape = 's32[1]{0}', space=sflag, size = 0x4, scoped, tag = 'scoped memory for tpu_custom_call.1']
    #allocation4 [shape = 's32[1]{0}', space=sflag, size = 0x4, scoped, tag = 'scoped memory for tpu_custom_call.1']
    #allocation5 [shape = 'u8[32768]{0}', space=vmem, size = 0x8000, scoped, tag = 'input window, operand 1, single buffered']
    #allocation6 [shape = 's32[1]{0}', space=sflag, size = 0x4, scoped, tag = 'scoped memory for tpu_custom_call.1']
    #allocation7 [shape = 'u8[1024]{0}', space=vmem, size = 0x400, scoped, tag = 'input window, operand 2, single buffered']
    #allocation8 [shape = 'u8[4096]{0}', space=vmem, size = 0x1000, scoped, tag = 'input window, operand 3, single buffered']
    #allocation9 [shape = 's32[1]{0}', space=sflag, size = 0x4, scoped, tag = 'scoped memory for tpu_custom_call.1']
    #allocation10 [shape = 'u8[4096]{0}', space=vmem, size = 0x1000, scoped, tag = 'output window, operand 0, single buffered']
    #allocation11 [shape = 'u8[4096]{0}', space=vmem, size = 0x1000, scoped, tag = 'output window, operand 1, single buffered']
    #allocation12 [shape = 's32[1]{0}', space=sflag, size = 0x4, scoped, tag = 'scoped memory for tpu_custom_call.1']
    #allocation13 [shape = 'u8[4096]{0}', space=vmem, size = 0x1000, scoped, tag = 'output window, operand 2, single buffered']
    %12 = vsyncpa [#allocation3], 0
    %13 = vsyncpa [#allocation6], 0
    %14 = vsyncpa [#allocation9], 0
    %15 = vsyncpa [#allocation4], 0
    %16 = vsyncpa [#allocation12], 0
    // Predicated region
    $region2: #{tpu_custom_call.1} parent=1 // pred_check
      _
    $region3: #{tpu_custom_call.1} parent=1 // pred_check_branch
      %18 = sbr.rel (0) target = $region5
    $region4: #{tpu_custom_call.1} parent=1 // pred_region
      %20 = vsyncadd [#allocation3], 0
      %s22 = sshll.u32 %s0, 4
      %s23 = int_to_ptr.hbm [resolvable:$true] %s22
      %s24 = sshll.u32 [#allocation2], 4
      %s25 = int_to_ptr.vmem [resolvable:$true] %s24
      %27 = dma.hbm_to_vmem [thread:$0]  %s23, 128, %s25, [#allocation3]
    $region5: #{tpu_custom_call.1} parent=1 // pred_fallthru
      _
    // Predicated region
    $region6: #{tpu_custom_call.1} parent=1 // pred_check
      _
    $region7: #{tpu_custom_call.1} parent=1 // pred_check_branch
      %29 = sbr.rel (0) target = $region9
    $region8: #{tpu_custom_call.1} parent=1 // pred_region
      %31 = vsyncadd [#allocation6], 0
      %s32 = sshll.u32 %s1, 4
      %s33 = int_to_ptr.hbm [resolvable:$true] %s32
      %s34 = sshll.u32 [#allocation5], 4
      %s35 = int_to_ptr.vmem [resolvable:$true] %s34
      %40 = dma.hbm_to_vmem [thread:$0]  %s33, 1024, %s35, [#allocation6], 256, 256, 16
    $region9: #{tpu_custom_call.1} parent=1 // pred_fallthru
      _
    // Predicated region
    $region10: #{tpu_custom_call.1} parent=1 // pred_check
      _
    $region11: #{tpu_custom_call.1} parent=1 // pred_check_branch
      %42 = sbr.rel (0) target = $region13
    $region12: #{tpu_custom_call.1} parent=1 // pred_region
      %44 = vsyncadd [#allocation6], 0
      %s46 = sshll.u32 %s2, 4
      %s47 = int_to_ptr.hbm [resolvable:$true] %s46
      %s48 = sshll.u32 [#allocation7], 4
      %s49 = int_to_ptr.vmem [resolvable:$true] %s48
      %51 = dma.hbm_to_vmem [thread:$0]  %s47, 32, %s49, [#allocation6]
    $region13: #{tpu_custom_call.1} parent=1 // pred_fallthru
      _
    // Predicated region
    $region14: #{tpu_custom_call.1} parent=1 // pred_check
      _
    $region15: #{tpu_custom_call.1} parent=1 // pred_check_branch
      %53 = sbr.rel (0) target = $region17
    $region16: #{tpu_custom_call.1} parent=1 // pred_region
      %55 = vsyncadd [#allocation9], 0
      %s57 = sshll.u32 %s3, 4
      %s58 = int_to_ptr.hbm [resolvable:$true] %s57
      %s59 = sshll.u32 [#allocation8], 4
      %s60 = int_to_ptr.vmem [resolvable:$true] %s59
      %62 = dma.hbm_to_vmem [thread:$0]  %s58, 128, %s60, [#allocation9]
    $region17: #{tpu_custom_call.1} parent=1 // pred_fallthru
      _
    // Predicated region
    $region18: #{tpu_custom_call.1} parent=1 // pred_check
      _
    $region19: #{tpu_custom_call.1} parent=1 // pred_check_branch
      %64 = sbr.rel (0) target = $region21
    $region20: #{tpu_custom_call.1} parent=1 // pred_region
      %66 = dma.done [#allocation3], 128
    $region21: #{tpu_custom_call.1} parent=1 // pred_fallthru
      _
    // Predicated region
    $region22: #{tpu_custom_call.1} parent=1 // pred_check
      _
    $region23: #{tpu_custom_call.1} parent=1 // pred_check_branch
      %68 = sbr.rel (0) target = $region25
    $region24: #{tpu_custom_call.1} parent=1 // pred_region
      %70 = dma.done [#allocation6], 1024
    $region25: #{tpu_custom_call.1} parent=1 // pred_fallthru
      _
    // Predicated region
    $region26: #{tpu_custom_call.1} parent=1 // pred_check
      _
    $region27: #{tpu_custom_call.1} parent=1 // pred_check_branch
      %72 = sbr.rel (0) target = $region29
    $region28: #{tpu_custom_call.1} parent=1 // pred_region
      %74 = dma.done [#allocation6], 32
    $region29: #{tpu_custom_call.1} parent=1 // pred_fallthru
      _
    // Predicated region
    $region30: #{tpu_custom_call.1} parent=1 // pred_check
      _
    $region31: #{tpu_custom_call.1} parent=1 // pred_check_branch
      %76 = sbr.rel (0) target = $region33
    $region32: #{tpu_custom_call.1} parent=1 // pred_region
      %78 = dma.done [#allocation9], 128
    $region33: #{tpu_custom_call.1} parent=1 // pred_fallthru
      _
    %v79 = vld [vmem:[#allocation2] sm:$0xff]
    %v80 = vld [vmem:[#allocation5] sm:$0xff]
    %v81 = vld [vmem:[#allocation5 + $0x8] sm:$0xff]
    %v82 = vld [vmem:[#allocation5 + $0x10] sm:$0xff]
    %v83 = vld [vmem:[#allocation5 + $0x18] sm:$0xff]
    %v84 = vld [vmem:[#allocation5 + $0x20] sm:$0xff]
    %v85 = vld [vmem:[#allocation5 + $0x28] sm:$0xff]
    %v86 = vld [vmem:[#allocation5 + $0x30] sm:$0xff]
    %v87 = vld [vmem:[#allocation5 + $0x38] sm:$0xff]
    %v88 = vld [vmem:[#allocation7] sm:$0x3]
    %v90 = vperm.slane %v88, 0
    %v91 = vperm.slane %v88, 1
    %vm94 = vcmask 261120
    %v96 = vsel %vm94, %v79, 0
    %98 = vmatpush.msra.mxu0 0.0
    %99 = vmatpush.msra.mxu0 0.0
    %100 = vmatpush.msra.mxu0 0.0
    %101 = vmatpush.msra.mxu0 0.0
    %102 = vmatpush.msra.mxu0 0.0
    %103 = vmatpush.msra.mxu0 0.0
    %104 = vmatpush.msra.mxu0 0.0
    %105 = vmatpush.msra.mxu0 0.0
    %106 = vmatpush.msra.mxu0 0.0
    %107 = vmatpush.msra.mxu0 0.0
    %108 = vmatpush.msra.mxu0 0.0
    %109 = vmatpush.msra.mxu0 0.0
    %110 = vmatpush.msra.mxu0 %v86
    %111 = vmatpush.msra.mxu0 %v84
    %112 = vmatpush.msra.mxu0 %v82
    %113 = vmatpush.msra.mxu0 %v80
    %114 = vmatmul.f32.gmra.mxu0 %v96
    %v115 = vpop.f32.mrf.mxu0
    %v116 = vadd.f32 %v90, %v115
    %117 = vdwg.mxu0
    %118 = vmatpush.msra.mxu0 0.0
    %119 = vmatpush.msra.mxu0 0.0
    %120 = vmatpush.msra.mxu0 0.0
    %121 = vmatpush.msra.mxu0 0.0
    %122 = vmatpush.msra.mxu0 0.0
    %123 = vmatpush.msra.mxu0 0.0
    %124 = vmatpush.msra.mxu0 0.0
    %125 = vmatpush.msra.mxu0 0.0
    %126 = vmatpush.msra.mxu0 0.0
    %127 = vmatpush.msra.mxu0 0.0
    %128 = vmatpush.msra.mxu0 0.0
    %129 = vmatpush.msra.mxu0 0.0
    %130 = vmatpush.msra.mxu0 %v87
    %131 = vmatpush.msra.mxu0 %v85
    %132 = vmatpush.msra.mxu0 %v83
    %133 = vmatpush.msra.mxu0 %v81
    %134 = vmatmul.f32.gmra.mxu0 %v96
    %v135 = vpop.f32.mrf.mxu0
    %v136 = vadd.f32 %v91, %v135
    %137 = vdwg.mxu0
    %v138 = vmax.f32 %v136, 0.0
    %v139 = vand.u32 2147483647, %v136
    %v140 = vsub.f32 0.0, %v139
    %v141 = vmul.f32 %v140, 1.442695
    %v142 = vpow.pop %v141
    %v143 = vadd.f32 %v142, 1.0
    %v144 = vlog2.pop %v143
    %v145 = vmul.f32 %v144, 0.6931472
    %v146 = vmul.f32 -0.5, %v142
    %v147 = vadd.f32 %v146, 1.0
    %v148 = vmul.f32 %v147, %v142
    %v149 = vand.u32 2147483647, %v142
    %vm150 = vcmp.lt.f32.partialorder %v149, 0.0004427343
    %v151 = vsel %vm150, %v148, %v145
    %v152 = vadd.f32 %v138, %v151
    %v153 = vmul.f32 %v152, 0.5
    %v154 = vmul.f32 %v153, 1.442695
    %v155 = vpow.pop %v154
    %v156 = vld [vmem:[#allocation8] sm:$0xff]
    %v157 = vmul.f32 %v155, %v156
    %v158 = vadd.f32 %v116, %v157
    %vm159 = vcmask 130048
    %160 = vst.msk [vmem:[#allocation10] sm:$0xff] %vm159, %v158
    %161 = vst.msk [vmem:[#allocation11] sm:$0xff] %vm159, %v116
    %162 = vst.msk [vmem:[#allocation13] sm:$0xff] %vm159, %v152
    // Predicated region
    $region34: #{tpu_custom_call.1} parent=1 // pred_check
      _
    $region35: #{tpu_custom_call.1} parent=1 // pred_check_branch
      %164 = sbr.rel (0) target = $region37
    $region36: #{tpu_custom_call.1} parent=1 // pred_region
      %166 = vsyncadd [#allocation4], 0
      %s168 = sshll.u32 [#allocation10], 4
      %s169 = int_to_ptr.vmem [resolvable:$true] %s168
      %s170 = sshll.u32 %s4, 4
      %s171 = int_to_ptr.hbm [resolvable:$true] %s170
      %173 = dma.vmem_to_hbm [thread:$0]  %s169, 128, %s171, [#allocation4]
    $region37: #{tpu_custom_call.1} parent=1 // pred_fallthru
      _
    // Predicated region
    $region38: #{tpu_custom_call.1} parent=1 // pred_check
      _
    $region39: #{tpu_custom_call.1} parent=1 // pred_check_branch
      %175 = sbr.rel (0) target = $region41
    $region40: #{tpu_custom_call.1} parent=1 // pred_region
      %177 = vsyncadd [#allocation12], 0
      %s179 = sshll.u32 [#allocation11], 4
      %s180 = int_to_ptr.vmem [resolvable:$true] %s179
      %s181 = sshll.u32 %s5, 4
      %s182 = int_to_ptr.hbm [resolvable:$true] %s181
      %184 = dma.vmem_to_hbm [thread:$0]  %s180, 128, %s182, [#allocation12]
    $region41: #{tpu_custom_call.1} parent=1 // pred_fallthru
      _
    // Predicated region
    $region42: #{tpu_custom_call.1} parent=1 // pred_check
      _
    $region43: #{tpu_custom_call.1} parent=1 // pred_check_branch
      %186 = sbr.rel (0) target = $region45
    $region44: #{tpu_custom_call.1} parent=1 // pred_region
      %188 = vsyncadd [#allocation12], 0
      %s190 = sshll.u32 [#allocation13], 4
      %s191 = int_to_ptr.vmem [resolvable:$true] %s190
      %s192 = sshll.u32 %s6, 4
      %s193 = int_to_ptr.hbm [resolvable:$true] %s192
      %195 = dma.vmem_to_hbm [thread:$0]  %s191, 128, %s193, [#allocation12]
    $region45: #{tpu_custom_call.1} parent=1 // pred_fallthru
      _
    // Predicated region
    $region46: #{tpu_custom_call.1} parent=1 // pred_check
      _
    $region47: #{tpu_custom_call.1} parent=1 // pred_check_branch
      %197 = sbr.rel (0) target = $region49
    $region48: #{tpu_custom_call.1} parent=1 // pred_region
      %199 = dma.done [#allocation4], 128
    $region49: #{tpu_custom_call.1} parent=1 // pred_fallthru
      _
    // Predicated region
    $region50: #{tpu_custom_call.1} parent=1 // pred_check
      _
    $region51: #{tpu_custom_call.1} parent=1 // pred_check_branch
      %201 = sbr.rel (0) target = $region53
    $region52: #{tpu_custom_call.1} parent=1 // pred_region
      %203 = dma.done [#allocation12], 128
    $region53: #{tpu_custom_call.1} parent=1 // pred_fallthru
      _
    // Predicated region
    $region54: #{tpu_custom_call.1} parent=1 // pred_check
      _
    $region55: #{tpu_custom_call.1} parent=1 // pred_check_branch
      %205 = sbr.rel (0) target = $region57
    $region56: #{tpu_custom_call.1} parent=1 // pred_region
      %207 = dma.done [#allocation12], 128
    $region57: #{tpu_custom_call.1} parent=1 // pred_fallthru
      _
    %208 = vsyncpa [#allocation3], 1
    %209 = vsyncpa [#allocation6], 1
    %210 = vsyncpa [#allocation9], 1
    %211 = vsyncpa [#allocation4], 1
    %212 = vsyncpa [#allocation12], 1

</llo_original>
